<compile_context>
chip_gen: v6e
topology: v6e:2x2x1
jax: 0.10.0
libtpu: 0.0.40
codegen_flags: <defaults>
</compile_context>

<pallas_src>
import jax
import jax.numpy as jnp
from jax.experimental import pallas as pl
from jax.experimental.pallas import tpu as pltpu

NUM_BINS = 17
NUM_ACTIONS = 11
HIDDEN = 250

# Padded (lane-friendly) sizes used inside the kernel.
HIDDEN_PAD = 256   # 2 x 128 lanes
OUT_PAD = 128      # MXU-friendly N for fc3; sliced to 11 in-kernel


def _round_up(x, m):
    return ((x + m - 1) // m) * m


def q_forward_kernel(s_ref, w1_ref, b1_ref, w2_ref, b2_ref, w3_ref, b3_ref,
                     out_ref):
    # fc1 + relu: bf16 operands on the MXU, f32 accumulate; elementwise in f32.
    h1 = jnp.dot(s_ref[...].astype(jnp.bfloat16), w1_ref[...],
                 preferred_element_type=jnp.float32) + b1_ref[...]
    h1 = jnp.maximum(h1, 0.0)
    # fc2 + relu
    h2 = jnp.dot(h1.astype(jnp.bfloat16), w2_ref[...],
                 preferred_element_type=jnp.float32) + b2_ref[...]
    h2 = jnp.maximum(h2, 0.0)
    # fc3, then sigmoid(z / 10) * 120 in f32; store only the 11 real columns.
    z = jnp.dot(h2.astype(jnp.bfloat16), w3_ref[...],
                preferred_element_type=jnp.float32) + b3_ref[...]
    q = jax.nn.sigmoid(z * 0.1) * 120.0
    out_ref[...] = q[:, :NUM_ACTIONS]


def prepare_params(params):
    """Pad logical (in,out) params to lane-friendly shapes and cast weights
    to bf16.  Call ONCE (not per forward)."""
    w1, b1, w2, b2, w3, b3 = params
    dh = HIDDEN_PAD - HIDDEN
    do = OUT_PAD - NUM_ACTIONS
    w1p = jnp.pad(w1, ((0, 0), (0, dh))).astype(jnp.bfloat16)
    w2p = jnp.pad(w2, ((0, dh), (0, dh))).astype(jnp.bfloat16)
    w3p = jnp.pad(w3, ((0, dh), (0, do))).astype(jnp.bfloat16)
    # Biases stay f32 (added to the f32 accumulator on the VPU).
    b1p = jnp.pad(b1, ((0, 0), (0, dh)))
    b2p = jnp.pad(b2, ((0, 0), (0, dh)))
    b3p = jnp.pad(b3, ((0, 0), (0, do)))
    return w1p, b1p, w2p, b2p, w3p, b3p


def _choose_tile(B, tb):
    """Batch tile: multiple of 8 (f32 sublane), capped so the grid has at
    least 2 steps when B allows it (engages both TensorCores on v7x)."""
    b_pad8 = _round_up(max(B, 1), 8)
    if b_pad8 <= 8:
        return 8
    return min(tb, _round_up((b_pad8 + 1) // 2, 8))


def q_forward(s, prepared_params, *, tb=512):
    """s: (B, NUM_BINS) float32 -> (B, NUM_ACTIONS) float32.

    prepared_params must come from prepare_params()."""
    B = s.shape[0]
    tb = _choose_tile(B, tb)
    b_pad = _round_up(B, tb)
    grid = (b_pad // tb,)

    s_p = jnp.pad(s, ((0, b_pad - B), (0, 0))) if b_pad != B else s
    w1p, b1p, w2p, b2p, w3p, b3p = prepared_params

    # Weights/biases: full-array blocks whose block index never changes, so
    # the pipeliner fetches them once and keeps them VMEM-resident across
    # batch tiles.  (pipeline_mode=pl.Buffered(1) would also drop the second
    # buffer copy; omitted for broad jax-version compatibility.)
    def resident(shape):
        return pl.BlockSpec(shape, lambda i: (0, 0))

    out_p = pl.pallas_call(
        q_forward_kernel,
        out_shape=jax.ShapeDtypeStruct((b_pad, NUM_ACTIONS), jnp.float32),
        grid=grid,
        in_specs=[
            pl.BlockSpec((tb, NUM_BINS), lambda i: (i, 0)),      # s tile
            resident((NUM_BINS, HIDDEN_PAD)),                    # w1 (bf16)
            resident((1, HIDDEN_PAD)),                           # b1 (f32)
            resident((HIDDEN_PAD, HIDDEN_PAD)),                  # w2 (bf16)
            resident((1, HIDDEN_PAD)),                           # b2 (f32)
            resident((HIDDEN_PAD, OUT_PAD)),                     # w3 (bf16)
            resident((1, OUT_PAD)),                              # b3 (f32)
        ],
        # Narrow (tb, 11) output block: last dim equals the full array dim,
        # so it is legal; avoids 128-lane padded stores + a second slice pass.
        out_specs=pl.BlockSpec((tb, NUM_ACTIONS), lambda i: (i, 0)),
        compiler_params=pltpu.CompilerParams(
            dimension_semantics=("parallel",)),
    )(s_p, w1p, b1p, w2p, b2p, w3p, b3p)

    # Only slice when the batch was actually padded.
    return out_p[:B] if b_pad != B else out_p


def init_params(key):
    """Deterministic init mimicking nn.Linear's uniform(-1/sqrt(fan_in), ...)."""
    def linear(key, fan_in, fan_out):
        kw, kb = jax.random.split(key)
        bound = 1.0 / jnp.sqrt(jnp.float32(fan_in))
        # stored as (in, out) so the kernel does x @ W
        w = jax.random.uniform(kw, (fan_in, fan_out), jnp.float32,
                               minval=-bound, maxval=bound)
        b = jax.random.uniform(kb, (1, fan_out), jnp.float32,
                               minval=-bound, maxval=bound)
        return w, b

    k1, k2, k3 = jax.random.split(key, 3)
    w1, b1 = linear(k1, NUM_BINS, HIDDEN)
    w2, b2 = linear(k2, HIDDEN, HIDDEN)
    w3, b3 = linear(k3, HIDDEN, NUM_ACTIONS)
    return (w1, b1, w2, b2, w3, b3)


def q_forward_ref(s, params):
    w1, b1, w2, b2, w3, b3 = params
    h1 = jnp.maximum(s @ w1 + b1, 0.0)
    h2 = jnp.maximum(h1 @ w2 + b2, 0.0)
    z = h2 @ w3 + b3
    return jax.nn.sigmoid(z / 10.0) * 120.0


if __name__ == "__main__":
    key = jax.random.PRNGKey(0)
    k_params, k_input = jax.random.split(key)

    params = init_params(k_params)
    prepared = prepare_params(params)   # pad + bf16-cast ONCE

    B = 32
    s = jax.random.normal(k_input, (B, NUM_BINS), jnp.float32)

    # B=32 -> tile shrinks to 16, grid=(2,): exercises the pipeline and the
    # >=2-grid-step rule for v7x megacore sharding.
    out = q_forward(s, prepared)
    out = jax.block_until_ready(out)

    ref = q_forward_ref(s, params)  # f32 reference
    assert out.shape == (B, NUM_ACTIONS)
    # bf16 matmul operands (f32 accumulate) on a 0..120 output range: allow a
    # looser absolute tolerance than the pure-f32 version.
    assert jnp.allclose(out, ref, atol=0.5, rtol=1e-2), (
        float(jnp.max(jnp.abs(out - ref))))

    print("KERNEL_OK")
</pallas_src>

<mosaic_0001>
module attributes {stable_mosaic.version = 11 : i64} {
  func.func @q_forward_kernel(%arg0: i32, %arg1: memref<16x17xf32, #tpu.memory_space<vmem>>, %arg2: memref<17x256xbf16, #tpu.memory_space<vmem>>, %arg3: memref<1x256xf32, #tpu.memory_space<vmem>>, %arg4: memref<256x256xbf16, #tpu.memory_space<vmem>>, %arg5: memref<1x256xf32, #tpu.memory_space<vmem>>, %arg6: memref<256x128xbf16, #tpu.memory_space<vmem>>, %arg7: memref<1x128xf32, #tpu.memory_space<vmem>>, %arg8: memref<16x11xf32, #tpu.memory_space<vmem>>) attributes {dimension_semantics = [#tpu.dimension_semantics<parallel>], iteration_bounds = array<i64: 2>, scalar_prefetch = 0 : i64, scratch_operands = 0 : i64, tpu.core_type = #tpu.core_type<tc>, window_params = [{transform_indices = @transform_0, window_bounds = array<i64: 16, 17>}, {pipeline_mode = #tpu.pipeline_mode<synchronous>, transform_indices = @transform_1, window_bounds = array<i64: 17, 256>}, {pipeline_mode = #tpu.pipeline_mode<synchronous>, transform_indices = @transform_2, window_bounds = array<i64: 1, 256>}, {pipeline_mode = #tpu.pipeline_mode<synchronous>, transform_indices = @transform_3, window_bounds = array<i64: 256, 256>}, {pipeline_mode = #tpu.pipeline_mode<synchronous>, transform_indices = @transform_4, window_bounds = array<i64: 1, 256>}, {pipeline_mode = #tpu.pipeline_mode<synchronous>, transform_indices = @transform_5, window_bounds = array<i64: 256, 128>}, {pipeline_mode = #tpu.pipeline_mode<synchronous>, transform_indices = @transform_6, window_bounds = array<i64: 1, 128>}, {transform_indices = @transform_7, window_bounds = array<i64: 16, 11>}]} {
    %c0 = arith.constant 0 : index
    %c0_0 = arith.constant 0 : index
    %0 = vector.load %arg1[%c0, %c0_0] : memref<16x17xf32, #tpu.memory_space<vmem>>, vector<16x17xf32>
    %1 = arith.truncf %0 : vector<16x17xf32> to vector<16x17xbf16>
    %c0_1 = arith.constant 0 : index
    %c0_2 = arith.constant 0 : index
    %2 = vector.load %arg2[%c0_1, %c0_2] : memref<17x256xbf16, #tpu.memory_space<vmem>>, vector<17x256xbf16>
    %cst = arith.constant dense<0.000000e+00> : vector<16x256xf32>
    %3 = tpu.matmul %1, %2, %cst {dimension_numbers = #tpu.dot_dimension_numbers<[1], [0], [0], [1], [0, 0, 1, 1], [], []>} : vector<16x17xbf16>, vector<17x256xbf16>, vector<16x256xf32> -> vector<16x256xf32>
    %c0_3 = arith.constant 0 : index
    %c0_4 = arith.constant 0 : index
    %4 = vector.load %arg3[%c0_3, %c0_4] : memref<1x256xf32, #tpu.memory_space<vmem>>, vector<1x256xf32>
    %5 = vector.broadcast %4 : vector<1x256xf32> to vector<16x256xf32>
    %6 = arith.addf %3, %5 : vector<16x256xf32>
    %cst_5 = arith.constant 0.000000e+00 : f32
    %7 = vector.broadcast %cst_5 : f32 to vector<16x256xf32>
    %8 = arith.maximumf %6, %7 : vector<16x256xf32>
    %9 = arith.truncf %8 : vector<16x256xf32> to vector<16x256xbf16>
    %c0_6 = arith.constant 0 : index
    %c0_7 = arith.constant 0 : index
    %10 = vector.load %arg4[%c0_6, %c0_7] : memref<256x256xbf16, #tpu.memory_space<vmem>>, vector<256x256xbf16>
    %cst_8 = arith.constant dense<0.000000e+00> : vector<16x256xf32>
    %11 = tpu.matmul %9, %10, %cst_8 {dimension_numbers = #tpu.dot_dimension_numbers<[1], [0], [0], [1], [0, 0, 1, 1], [], []>} : vector<16x256xbf16>, vector<256x256xbf16>, vector<16x256xf32> -> vector<16x256xf32>
    %c0_9 = arith.constant 0 : index
    %c0_10 = arith.constant 0 : index
    %12 = vector.load %arg5[%c0_9, %c0_10] : memref<1x256xf32, #tpu.memory_space<vmem>>, vector<1x256xf32>
    %13 = vector.broadcast %12 : vector<1x256xf32> to vector<16x256xf32>
    %14 = arith.addf %11, %13 : vector<16x256xf32>
    %cst_11 = arith.constant 0.000000e+00 : f32
    %15 = vector.broadcast %cst_11 : f32 to vector<16x256xf32>
    %16 = arith.maximumf %14, %15 : vector<16x256xf32>
    %17 = arith.truncf %16 : vector<16x256xf32> to vector<16x256xbf16>
    %c0_12 = arith.constant 0 : index
    %c0_13 = arith.constant 0 : index
    %18 = vector.load %arg6[%c0_12, %c0_13] : memref<256x128xbf16, #tpu.memory_space<vmem>>, vector<256x128xbf16>
    %cst_14 = arith.constant dense<0.000000e+00> : vector<16x128xf32>
    %19 = tpu.matmul %17, %18, %cst_14 {dimension_numbers = #tpu.dot_dimension_numbers<[1], [0], [0], [1], [0, 0, 1, 1], [], []>} : vector<16x256xbf16>, vector<256x128xbf16>, vector<16x128xf32> -> vector<16x128xf32>
    %c0_15 = arith.constant 0 : index
    %c0_16 = arith.constant 0 : index
    %20 = vector.load %arg7[%c0_15, %c0_16] : memref<1x128xf32, #tpu.memory_space<vmem>>, vector<1x128xf32>
    %21 = vector.broadcast %20 : vector<1x128xf32> to vector<16x128xf32>
    %22 = arith.addf %19, %21 : vector<16x128xf32>
    %cst_17 = arith.constant 1.000000e-01 : f32
    %23 = vector.broadcast %cst_17 : f32 to vector<16x128xf32>
    %24 = arith.mulf %22, %23 : vector<16x128xf32>
    %25 = arith.negf %24 : vector<16x128xf32>
    %26 = math.exp %25 : vector<16x128xf32>
    %cst_18 = arith.constant 1.000000e+00 : f32
    %27 = vector.broadcast %cst_18 : f32 to vector<16x128xf32>
    %28 = arith.addf %27, %26 : vector<16x128xf32>
    %29 = arith.divf %27, %28 : vector<16x128xf32>
    %cst_19 = arith.constant 1.200000e+02 : f32
    %30 = vector.broadcast %cst_19 : f32 to vector<16x128xf32>
    %31 = arith.mulf %29, %30 : vector<16x128xf32>
    %32 = vector.extract_strided_slice %31 {offsets = [0, 0], sizes = [16, 11], strides = [1, 1]} : vector<16x128xf32> to vector<16x11xf32>
    %c0_20 = arith.constant 0 : index
    %c0_21 = arith.constant 0 : index
    %33 = vector.load %arg8[%c0_20, %c0_21] : memref<16x11xf32, #tpu.memory_space<vmem>>, vector<16x11xf32>
    tpu.vector_store %arg8[%c0_20, %c0_21], %32 {strides = array<i32>} : memref<16x11xf32, #tpu.memory_space<vmem>>, vector<16x11xf32>,
    return
  }
  func.func @transform_0(%arg0: i32) -> (i32, i32) {
    %c0_i32 = arith.constant 0 : i32
    %c0_i32_0 = arith.constant 0 : i32
    return %arg0, %c0_i32 : i32, i32
  }
  func.func @transform_1(%arg0: i32) -> (i32, i32) {
    %c0_i32 = arith.constant 0 : i32
    %c0_i32_0 = arith.constant 0 : i32
    %c0_i32_1 = arith.constant 0 : i32
    return %c0_i32, %c0_i32_0 : i32, i32
  }
  func.func @transform_2(%arg0: i32) -> (i32, i32) {
    %c0_i32 = arith.constant 0 : i32
    %c0_i32_0 = arith.constant 0 : i32
    %c0_i32_1 = arith.constant 0 : i32
    return %c0_i32, %c0_i32_0 : i32, i32
  }
  func.func @transform_3(%arg0: i32) -> (i32, i32) {
    %c0_i32 = arith.constant 0 : i32
    %c0_i32_0 = arith.constant 0 : i32
    %c0_i32_1 = arith.constant 0 : i32
    return %c0_i32, %c0_i32_0 : i32, i32
  }
  func.func @transform_4(%arg0: i32) -> (i32, i32) {
    %c0_i32 = arith.constant 0 : i32
    %c0_i32_0 = arith.constant 0 : i32
    %c0_i32_1 = arith.constant 0 : i32
    return %c0_i32, %c0_i32_0 : i32, i32
  }
  func.func @transform_5(%arg0: i32) -> (i32, i32) {
    %c0_i32 = arith.constant 0 : i32
    %c0_i32_0 = arith.constant 0 : i32
    %c0_i32_1 = arith.constant 0 : i32
    return %c0_i32, %c0_i32_0 : i32, i32
  }
  func.func @transform_6(%arg0: i32) -> (i32, i32) {
    %c0_i32 = arith.constant 0 : i32
    %c0_i32_0 = arith.constant 0 : i32
    %c0_i32_1 = arith.constant 0 : i32
    return %c0_i32, %c0_i32_0 : i32, i32
  }
  func.func @transform_7(%arg0: i32) -> (i32, i32) {
    %c0_i32 = arith.constant 0 : i32
    %c0_i32_0 = arith.constant 0 : i32
    return %arg0, %c0_i32 : i32, i32
  }
}

</mosaic_0001>

<llo_original>
// kernel: tpu_custom_call.1
$region0: #{tpu_custom_call.1}
  #allocation0 [shape = 'u32[]', space=smem, size = 0x4, offset = 0x4, fixed_abs, tag = 'smem constant byte address 0x4 - core index']
  #allocation1 [shape = 'u32[144,128]{1,0:T(1,128)}', space=vmem, size = 0x12000, scoped, tag = 'internal scratch']
  %s0 = inlined_call_operand.vmem [shape: f32[32,17], index: 0, kind: input, shape index: {}]
  %s1 = inlined_call_operand.vmem [shape: bf16[17,256], index: 1, kind: input, shape index: {}]
  %s2 = inlined_call_operand.vmem [shape: f32[1,256], index: 2, kind: input, shape index: {}]
  %s3 = inlined_call_operand.hbm [shape: bf16[256,256], index: 3, kind: input, shape index: {}]
  %s4 = inlined_call_operand.vmem [shape: f32[1,256], index: 4, kind: input, shape index: {}]
  %s5 = inlined_call_operand.hbm [shape: bf16[256,128], index: 5, kind: input, shape index: {}]
  %s6 = inlined_call_operand.vmem [shape: f32[1,128], index: 6, kind: input, shape index: {}]
  %s7 = inlined_call_operand.vmem [shape: f32[32,11], index: 7, kind: output, shape index: {}]
  %s8 = sld [smem:[#allocation0]]
  $region69: #{tpu_custom_call.1} parent=0
    _
  %s10 = ssub.s32 1, %s8
  %s11 = scalar_select 0, %s10, %s8
  $region1: #{tpu_custom_call.1} parent=0
    #allocation2 [shape = 'u8[131072]{0}', space=vmem, size = 0x20000, scoped, tag = 'input window, operand 3, single buffered']
    #allocation3 [shape = 's32[2]{0}', space=sflag, size = 0x8, scoped, tag = 'scoped memory for tpu_custom_call.1']
    #allocation4 [shape = 'u8[65536]{0}', space=vmem, size = 0x10000, scoped, tag = 'input window, operand 5, single buffered']
    #allocation5 [shape = 's32[1]{0}', space=sflag, size = 0x4, scoped, tag = 'scoped memory for tpu_custom_call.1']
    %12 = vsyncpa [#allocation3], 0
    %13 = vsyncpa [#allocation5], 0
    loop: start=0, step=1, limit=4
    $region2: #{tpu_custom_call.1} parent=1 // loop_pre_header
      _
    $region3: #{tpu_custom_call.1} parent=1 // loop_header
      %s15 = sphi 0, %s19
      %p16 = scmp.ge.s32.totalorder %s15, 4
      %s25 = sphi 0, %s27
      %s28 = sphi 0, %s25
      %s29 = sphi 0, %s28
      %s45 = sphi 0, %s29
      %s49 = sphi 0, %s49
      %s51 = sphi 0, %s49
      %s52 = sphi 0, %s51
      %s66 = sphi 0, %s52
      %s70 = sphi 0, %s70
      %s72 = sphi 0, %s70
      %s73 = sphi 0, %s72
      %s87 = sphi 0, %s73
      %s91 = sphi 0, %s91
      %s93 = sphi 0, %s91
      %s94 = sphi 0, %s93
      %s108 = sphi 0, %s94
      %s112 = sphi 0, %s112
      %s114 = sphi 0, %s112
      %s115 = sphi 0, %s114
      %s129 = sphi 0, %s115
      %s133 = sphi 0, %s133
      %s135 = sphi 0, %s133
      %s136 = sphi 0, %s135
      %s150 = sphi 0, %s136
      %s154 = sphi 0, %s154
      %s156 = sphi 0, %s154
      %s157 = sphi 0, %s156
      %s171 = sphi 0, %s157
      %s177 = sphi 0, %s179
      %s180 = sphi 0, %s177
      %s181 = sphi 0, %s180
      %s197 = sphi 0, %s181
    $region4: #{tpu_custom_call.1} parent=1 // loop_header_branch
      %18 = sbr.rel (%p16) target = $region8
    $region5: #{tpu_custom_call.1} parent=1 // loop_body
      %s20 = ssub.s32 %s15, 1
      %s21 = ssub.s32 %s15, 2
      %s22 = sadd.s32 %s15, 1
      %s23 = ssub.s32 %s15, %s22
      %p24 = scmp.eq.s32.totalorder %s23, 0
      %s26 = sadd.s32 %s25, 1
      %s27 = scalar_select %p24, %s25, %s26
      %p30 = pneg %p24
      %p31 = scmp.eq.s32.totalorder %s15, 1
      %p32 = por %p30, %p31
      %p33 = scmp.ne.s32.totalorder %s25, %s28
      %p34 = scmp.eq.s32.totalorder %s15, 0
      %p35 = por %p33, %p34
      %p36 = scmp.ne.s32.totalorder %s25, %s28
      %p37 = scmp.eq.s32.totalorder %s20, 1
      %p38 = por %p36, %p37
      %p39 = scmp.ne.s32.totalorder %s28, %s29
      %p40 = scmp.eq.s32.totalorder %s20, 0
      %p41 = por %p39, %p40
      %p42 = scmp.ne.s32.totalorder %s28, %s29
      %p43 = scmp.eq.s32.totalorder %s21, 1
      %p44 = por %p42, %p43
      %p46 = scmp.ne.s32.totalorder %s29, %s45
      %p47 = scmp.eq.s32.totalorder %s21, 0
      %p48 = por %p46, %p47
      %s50 = sadd.s32 %s49, 1
      %p53 = scmp.eq.s32.totalorder %s15, 1
      %p54 = scmp.ne.s32.totalorder %s49, %s51
      %p55 = scmp.eq.s32.totalorder %s15, 0
      %p56 = por %p54, %p55
      %p57 = scmp.ne.s32.totalorder %s49, %s51
      %p58 = scmp.eq.s32.totalorder %s20, 1
      %p59 = por %p57, %p58
      %p60 = scmp.ne.s32.totalorder %s51, %s52
      %p61 = scmp.eq.s32.totalorder %s20, 0
      %p62 = por %p60, %p61
      %p63 = scmp.ne.s32.totalorder %s51, %s52
      %p64 = scmp.eq.s32.totalorder %s21, 1
      %p65 = por %p63, %p64
      %p67 = scmp.ne.s32.totalorder %s52, %s66
      %p68 = scmp.eq.s32.totalorder %s21, 0
      %p69 = por %p67, %p68
      %s71 = sadd.s32 %s70, 1
      %p74 = scmp.eq.s32.totalorder %s15, 1
      %p75 = scmp.ne.s32.totalorder %s70, %s72
      %p76 = scmp.eq.s32.totalorder %s15, 0
      %p77 = por %p75, %p76
      %p78 = scmp.ne.s32.totalorder %s70, %s72
      %p79 = scmp.eq.s32.totalorder %s20, 1
      %p80 = por %p78, %p79
      %p81 = scmp.ne.s32.totalorder %s72, %s73
      %p82 = scmp.eq.s32.totalorder %s20, 0
      %p83 = por %p81, %p82
      %p84 = scmp.ne.s32.totalorder %s72, %s73
      %p85 = scmp.eq.s32.totalorder %s21, 1
      %p86 = por %p84, %p85
      %p88 = scmp.ne.s32.totalorder %s73, %s87
      %p89 = scmp.eq.s32.totalorder %s21, 0
      %p90 = por %p88, %p89
      %s92 = sadd.s32 %s91, 1
      %p95 = scmp.eq.s32.totalorder %s15, 1
      %p96 = scmp.ne.s32.totalorder %s91, %s93
      %p97 = scmp.eq.s32.totalorder %s15, 0
      %p98 = por %p96, %p97
      %p99 = scmp.ne.s32.totalorder %s91, %s93
      %p100 = scmp.eq.s32.totalorder %s20, 1
      %p101 = por %p99, %p100
      %p102 = scmp.ne.s32.totalorder %s93, %s94
      %p103 = scmp.eq.s32.totalorder %s20, 0
      %p104 = por %p102, %p103
      %p105 = scmp.ne.s32.totalorder %s93, %s94
      %p106 = scmp.eq.s32.totalorder %s21, 1
      %p107 = por %p105, %p106
      %p109 = scmp.ne.s32.totalorder %s94, %s108
      %p110 = scmp.eq.s32.totalorder %s21, 0
      %p111 = por %p109, %p110
      %s113 = sadd.s32 %s112, 1
      %p116 = scmp.eq.s32.totalorder %s15, 1
      %p117 = scmp.ne.s32.totalorder %s112, %s114
      %p118 = scmp.eq.s32.totalorder %s15, 0
      %p119 = por %p117, %p118
      %p120 = scmp.ne.s32.totalorder %s112, %s114
      %p121 = scmp.eq.s32.totalorder %s20, 1
      %p122 = por %p120, %p121
      %p123 = scmp.ne.s32.totalorder %s114, %s115
      %p124 = scmp.eq.s32.totalorder %s20, 0
      %p125 = por %p123, %p124
      %p126 = scmp.ne.s32.totalorder %s114, %s115
      %p127 = scmp.eq.s32.totalorder %s21, 1
      %p128 = por %p126, %p127
      %p130 = scmp.ne.s32.totalorder %s115, %s129
      %p131 = scmp.eq.s32.totalorder %s21, 0
      %p132 = por %p130, %p131
      %s134 = sadd.s32 %s133, 1
      %p137 = scmp.eq.s32.totalorder %s15, 1
      %p138 = scmp.ne.s32.totalorder %s133, %s135
      %p139 = scmp.eq.s32.totalorder %s15, 0
      %p140 = por %p138, %p139
      %p141 = scmp.ne.s32.totalorder %s133, %s135
      %p142 = scmp.eq.s32.totalorder %s20, 1
      %p143 = por %p141, %p142
      %p144 = scmp.ne.s32.totalorder %s135, %s136
      %p145 = scmp.eq.s32.totalorder %s20, 0
      %p146 = por %p144, %p145
      %p147 = scmp.ne.s32.totalorder %s135, %s136
      %p148 = scmp.eq.s32.totalorder %s21, 1
      %p149 = por %p147, %p148
      %p151 = scmp.ne.s32.totalorder %s136, %s150
      %p152 = scmp.eq.s32.totalorder %s21, 0
      %p153 = por %p151, %p152
      %s155 = sadd.s32 %s154, 1
      %p158 = scmp.eq.s32.totalorder %s15, 1
      %p159 = scmp.ne.s32.totalorder %s154, %s156
      %p160 = scmp.eq.s32.totalorder %s15, 0
      %p161 = por %p159, %p160
      %p162 = scmp.ne.s32.totalorder %s154, %s156
      %p163 = scmp.eq.s32.totalorder %s20, 1
      %p164 = por %p162, %p163
      %p165 = scmp.ne.s32.totalorder %s156, %s157
      %p166 = scmp.eq.s32.totalorder %s20, 0
      %p167 = por %p165, %p166
      %p168 = scmp.ne.s32.totalorder %s156, %s157
      %p169 = scmp.eq.s32.totalorder %s21, 1
      %p170 = por %p168, %p169
      %p172 = scmp.ne.s32.totalorder %s157, %s171
      %p173 = scmp.eq.s32.totalorder %s21, 0
      %p174 = por %p172, %p173
      %s175 = ssub.s32 %s15, %s22
      %p176 = scmp.eq.s32.totalorder %s175, 0
      %s178 = sadd.s32 %s177, 1
      %s179 = scalar_select %p176, %s177, %s178
      %p182 = pneg %p176
      %p183 = scmp.eq.s32.totalorder %s15, 1
      %p184 = por %p182, %p183
      %p185 = scmp.ne.s32.totalorder %s177, %s180
      %p186 = scmp.eq.s32.totalorder %s15, 0
      %p187 = por %p185, %p186
      %p188 = scmp.ne.s32.totalorder %s177, %s180
      %p189 = scmp.eq.s32.totalorder %s20, 1
      %p190 = por %p188, %p189
      %p191 = scmp.ne.s32.totalorder %s180, %s181
      %p192 = scmp.eq.s32.totalorder %s20, 0
      %p193 = por %p191, %p192
      %p194 = scmp.ne.s32.totalorder %s180, %s181
      %p195 = scmp.eq.s32.totalorder %s21, 1
      %p196 = por %p194, %p195
      %p198 = scmp.ne.s32.totalorder %s181, %s197
      %p199 = scmp.eq.s32.totalorder %s21, 0
      %p200 = por %p198, %p199
      %p201 = scmp.le.s32.totalorder 1, %s15
      %p202 = scmp.lt.s32.totalorder %s15, 3
      %p203 = pnand %p201, %p202
      %p204 = pneg %p203
      // Predicated region
      $region9: #{tpu_custom_call.1} parent=5 // pred_check
        _
      $region10: #{tpu_custom_call.1} parent=5 // pred_check_branch
        %206 = sbr.rel (%p203) target = $region12
      $region11: #{tpu_custom_call.1} parent=5 // pred_region
        %s207 = ssub.s32 %s15, 1
        // Predicated region
        $region13: #{tpu_custom_call.1} parent=11 // pred_check
          %p208 = pneg %p62
        $region14: #{tpu_custom_call.1} parent=11 // pred_check_branch
          %210 = sbr.rel (%p208) target = $region16
        $region15: #{tpu_custom_call.1} parent=11 // pred_region
          _
        $region16: #{tpu_custom_call.1} parent=11 // pred_fallthru
          _
        // Predicated region
        $region17: #{tpu_custom_call.1} parent=11 // pred_check
          %p211 = pneg %p83
        $region18: #{tpu_custom_call.1} parent=11 // pred_check_branch
          %213 = sbr.rel (%p211) target = $region20
        $region19: #{tpu_custom_call.1} parent=11 // pred_region
          _
        $region20: #{tpu_custom_call.1} parent=11 // pred_fallthru
          _
        // Predicated region
        $region21: #{tpu_custom_call.1} parent=11 // pred_check
          %p214 = pneg %p104
        $region22: #{tpu_custom_call.1} parent=11 // pred_check_branch
          %216 = sbr.rel (%p214) target = $region24
        $region23: #{tpu_custom_call.1} parent=11 // pred_region
          %s218 = ssub.s32 4096, 4096
          %219 = vsyncadd [#allocation3], %s218
          %s220 = sshll.u32 [#allocation2], 4
          %s221 = int_to_ptr.vmem [resolvable:$true] %s220
          %226 = dma.hbm_to_vmem [thread:$0]  %s3, 4096, %s221, [#allocation3], 128, 128, 8
        $region24: #{tpu_custom_call.1} parent=11 // pred_fallthru
          _
        // Predicated region
        $region25: #{tpu_custom_call.1} parent=11 // pred_check
          %p227 = pneg %p125
        $region26: #{tpu_custom_call.1} parent=11 // pred_check_branch
          %229 = sbr.rel (%p227) target = $region28
        $region27: #{tpu_custom_call.1} parent=11 // pred_region
          _
        $region28: #{tpu_custom_call.1} parent=11 // pred_fallthru
          _
        // Predicated region
        $region29: #{tpu_custom_call.1} parent=11 // pred_check
          %p230 = pneg %p146
        $region30: #{tpu_custom_call.1} parent=11 // pred_check_branch
          %232 = sbr.rel (%p230) target = $region32
        $region31: #{tpu_custom_call.1} parent=11 // pred_region
          %s234 = ssub.s32 2048, 2048
          %235 = vsyncadd [#allocation5], %s234
          %s236 = sshll.u32 [#allocation4], 4
          %s237 = int_to_ptr.vmem [resolvable:$true] %s236
          %242 = dma.hbm_to_vmem [thread:$0]  %s5, 2048, %s237, [#allocation5], 64, 64, 4
        $region32: #{tpu_custom_call.1} parent=11 // pred_fallthru
          _
        // Predicated region
        $region33: #{tpu_custom_call.1} parent=11 // pred_check
          %p243 = pneg %p167
        $region34: #{tpu_custom_call.1} parent=11 // pred_check_branch
          %245 = sbr.rel (%p243) target = $region36
        $region35: #{tpu_custom_call.1} parent=11 // pred_region
          _
        $region36: #{tpu_custom_call.1} parent=11 // pred_fallthru
          _
      $region12: #{tpu_custom_call.1} parent=5 // pred_fallthru
        _
      %p246 = scmp.lt.s32.totalorder %s15, 2
      // Predicated region
      $region37: #{tpu_custom_call.1} parent=5 // pred_check
        %p247 = pneg %p246
      $region38: #{tpu_custom_call.1} parent=5 // pred_check_branch
        %249 = sbr.rel (%p247) target = $region40
      $region39: #{tpu_custom_call.1} parent=5 // pred_region
        // Predicated region
        $region41: #{tpu_custom_call.1} parent=39 // pred_check
          %p250 = pneg %p35
        $region42: #{tpu_custom_call.1} parent=39 // pred_check_branch
          %252 = sbr.rel (%p250) target = $region44
        $region43: #{tpu_custom_call.1} parent=39 // pred_region
          %s253 = smul.u32 2, %s15
          %p254 = scmp.lt.s32.totalorder %s253, 3
          %s255 = scalar_select %p254, %s253, 3
          %s256 = smul.addr %s255, 8
          %s257 = scalar_lea.vmem %s0, %s256
          %s258 = smul.u32 2, %s15
        $region44: #{tpu_custom_call.1} parent=39 // pred_fallthru
          _
      $region40: #{tpu_custom_call.1} parent=5 // pred_fallthru
        _
      %p259 = scmp.le.s32.totalorder 1, %s15
      %p260 = scmp.lt.s32.totalorder %s15, 3
      %p261 = pnand %p259, %p260
      %p262 = pneg %p261
      // Predicated region
      $region45: #{tpu_custom_call.1} parent=5 // pred_check
        _
      $region46: #{tpu_custom_call.1} parent=5 // pred_check_branch
        %264 = sbr.rel (%p261) target = $region48
      $region47: #{tpu_custom_call.1} parent=5 // pred_region
        %s265 = ssub.s32 %s15, 1
        // Predicated region
        $region49: #{tpu_custom_call.1} parent=47 // pred_check
          %p266 = pneg %p104
        $region50: #{tpu_custom_call.1} parent=47 // pred_check_branch
          %268 = sbr.rel (%p266) target = $region52
        $region51: #{tpu_custom_call.1} parent=47 // pred_region
          %269 = dma.done [#allocation3], 4096
        $region52: #{tpu_custom_call.1} parent=47 // pred_fallthru
          _
        // Predicated region
        $region53: #{tpu_custom_call.1} parent=47 // pred_check
          %p270 = pneg %p146
        $region54: #{tpu_custom_call.1} parent=47 // pred_check_branch
          %272 = sbr.rel (%p270) target = $region56
        $region55: #{tpu_custom_call.1} parent=47 // pred_region
          %273 = dma.done [#allocation5], 2048
        $region56: #{tpu_custom_call.1} parent=47 // pred_fallthru
          _
        %s274 = smul.u32 2, %s20
        %p275 = scmp.lt.s32.totalorder %s274, 3
        %s276 = scalar_select %p275, %s274, 3
        %s277 = smul.addr %s276, 8
        %s278 = scalar_lea.vmem %s0, %s277
        %p279 = pneg %p41
        %p280 = pneg %p38
        %p281 = pneg %p62
        %p282 = pneg %p59
        %p283 = pneg %p83
        %p284 = pneg %p80
        %p285 = pneg %p104
        %p286 = pneg %p101
        %p287 = pneg %p125
        %p288 = pneg %p122
        %p289 = pneg %p146
        %p290 = pneg %p143
        %p291 = pneg %p167
        %p292 = pneg %p164
        %p293 = pneg %p193
        %p294 = pneg %p190
        %s295 = smul.u32 2, %s20
        %p296 = scmp.lt.s32.totalorder %s295, 3
        %s297 = scalar_select %p296, %s295, 3
        %s298 = smul.addr %s297, 8
        %s299 = scalar_lea.vmem %s7, %s298
        %s300 = smul.u32 2, %s20
        %p301 = scmp.lt.s32.totalorder %s300, 3
        %s302 = scalar_select %p301, %s300, 3
        %s303 = smul.addr %s302, 8
        %s304 = scalar_lea.vmem %s0, %s303
        %s305 = smul.u32 2, %s20
        %s306 = smul.u32 2, %s20
        %p307 = scmp.lt.s32.totalorder %s306, 3
        %s308 = scalar_select %p307, %s306, 3
        %s309 = smul.addr %s308, 8
        %s310 = scalar_lea.vmem %s7, %s309
        %s311 = smul.u32 2, %s20
        %v313 = vld [vmem:[%s304] sm:$0xff]
        %v314 = vld [vmem:[%s304 + $0x8] sm:$0xff]
        %v315 = vpack.c.bf16 %v314, %v313
        %v316 = vld [vmem:[%s1] sm:$0xff]
        %v317 = vld [vmem:[%s1 + $0x8] sm:$0xff]
        %v318 = vld [vmem:[%s1 + $0x10] sm:$0x11]
        %v319 = vld [vmem:[%s2] sm:$0x3]
        %v321 = vlaneseq
        %v322 = vshrl.u32 %v321, 7
        %v323 = vsub.s32 0, %v322
        %v324 = vrot.slane %v319, %v323
        %v325 = vlaneseq
        %v326 = vshrl.u32 %v325, 7
        %v327 = vsub.s32 1, %v326
        %v328 = vrot.slane %v319, %v327
        %v334 = vunpack.c.l.b16 %v316
        %v335 = vunpack.c.h.b16 %v316
        %v336 = vunpack.c.l.b16 %v317
        %v337 = vunpack.c.h.b16 %v317
        %v338 = vunpack.c.l.b16 %v318
        %v339 = vunpack.c.h.b16 %v318
        %v340 = vpack.c.b16 %v336, %v334
        %v341 = vpack.c.b16 %v337, %v335
        %v342 = vpack.c.b16 %v338, %v338
        %v343 = vpack.c.b16 %v339, %v339
        %vm346 = vcmask 138240
        %v348 = vsel %vm346, %v315, 0
        %vm350 = vcmask 1040384
        %v351 = vsel 0, 4294967295, 65535
        %v352 = vsel %vm350, %v351, 0
        %v354 = vand.u32 %v342, %v352
        %v357 = vand.u32 %v343, %v352
        %359 = vmatprep.subr.bf16.mxu0 0
        %360 = vmatpush1.bf16.msra.mxu0 0
        %361 = vmatprep.subr.bf16.mxu0 0
        %362 = vmatpush1.bf16.msra.mxu0 0
        %363 = vmatprep.subr.bf16.mxu0 0
        %364 = vmatpush1.bf16.msra.mxu0 0
        %365 = vmatprep.subr.bf16.mxu0 0
        %366 = vmatpush1.bf16.msra.mxu0 0
        %367 = vmatprep.subr.bf16.mxu0 0
        %368 = vmatpush1.bf16.msra.mxu0 0
        %369 = vmatprep.subr.bf16.mxu0 0
        %370 = vmatpush1.bf16.msra.mxu0 0
        %371 = vmatprep.subr.bf16.mxu0 %v357
        %372 = vmatpush1.bf16.msra.mxu0 %v354
        %373 = vmatprep.subr.bf16.mxu0 %v341
        %374 = vmatpush1.bf16.msra.mxu0 %v340
        %375 = vmatprep.subr.bf16.mxu0 0
        %376 = vmatpush2.bf16.msra.mxu0 0
        %377 = vmatprep.subr.bf16.mxu0 0
        %378 = vmatpush2.bf16.msra.mxu0 0
        %379 = vmatprep.subr.bf16.mxu0 0
        %380 = vmatpush2.bf16.msra.mxu0 0
        %381 = vmatprep.subr.bf16.mxu0 0
        %382 = vmatpush2.bf16.msra.mxu0 0
        %383 = vmatprep.subr.bf16.mxu0 0
        %384 = vmatpush2.bf16.msra.mxu0 0
        %385 = vmatprep.subr.bf16.mxu0 0
        %386 = vmatpush2.bf16.msra.mxu0 0
        %387 = vmatprep.subr.bf16.mxu0 0
        %388 = vmatpush2.bf16.msra.mxu0 0
        %389 = vmatprep.subr.bf16.mxu0 0
        %390 = vmatpush2.bf16.msra.mxu0 0
        %391 = vmatprep.mubr.bf16.mxu0 0
        %392 = vmatmul.mubr.bf16.gmra.mxu0 %v348
        %v393 = vpop.f32.mrf.mxu0
        %v394 = vadd.f32 %v324, %v393
        %v395 = vpop.f32.mrf.mxu0
        %v396 = vadd.f32 %v328, %v395
        %v397 = vpop.f32.mrf.mxu0
        %v398 = vadd.f32 %v324, %v397
        %v399 = vpop.f32.mrf.mxu0
        %v400 = vadd.f32 %v328, %v399
        %401 = vdwg.mxu0
        %v402 = vmax.f32 %v394, 0.0
        %v403 = vmax.f32 %v396, 0.0
        %v404 = vmax.f32 %v398, 0.0
        %v405 = vmax.f32 %v400, 0.0
        %v406 = vpack.c.bf16 %v404, %v402
        %v407 = vpack.c.bf16 %v405, %v403
        %v408 = vld [vmem:[#allocation2] sm:$0xff]
        %v409 = vld [vmem:[#allocation2 + $0x8] sm:$0xff]
        %v410 = vld [vmem:[#allocation2 + $0x10] sm:$0xff]
        %v411 = vld [vmem:[#allocation2 + $0x18] sm:$0xff]
        %v412 = vld [vmem:[#allocation2 + $0x20] sm:$0xff]
        %v413 = vld [vmem:[#allocation2 + $0x28] sm:$0xff]
        %v414 = vld [vmem:[#allocation2 + $0x30] sm:$0xff]
        %v415 = vld [vmem:[#allocation2 + $0x38] sm:$0xff]
        %v416 = vld [vmem:[#allocation2 + $0x40] sm:$0xff]
        %v417 = vld [vmem:[#allocation2 + $0x48] sm:$0xff]
        %v418 = vld [vmem:[#allocation2 + $0x50] sm:$0xff]
        %v419 = vld [vmem:[#allocation2 + $0x58] sm:$0xff]
        %v420 = vld [vmem:[#allocation2 + $0x60] sm:$0xff]
        %v421 = vld [vmem:[#allocation2 + $0x68] sm:$0xff]
        %v422 = vld [vmem:[#allocation2 + $0x70] sm:$0xff]
        %v423 = vld [vmem:[#allocation2 + $0x78] sm:$0xff]
        %v424 = vld [vmem:[#allocation2 + $0x80] sm:$0xff]
        %v425 = vld [vmem:[#allocation2 + $0x88] sm:$0xff]
        %v426 = vld [vmem:[#allocation2 + $0x90] sm:$0xff]
        %v427 = vld [vmem:[#allocation2 + $0x98] sm:$0xff]
        %v428 = vld [vmem:[#allocation2 + $0xa0] sm:$0xff]
        %v429 = vld [vmem:[#allocation2 + $0xa8] sm:$0xff]
        %v430 = vld [vmem:[#allocation2 + $0xb0] sm:$0xff]
        %v431 = vld [vmem:[#allocation2 + $0xb8] sm:$0xff]
        %v432 = vld [vmem:[#allocation2 + $0xc0] sm:$0xff]
        %v433 = vld [vmem:[#allocation2 + $0xc8] sm:$0xff]
        %v434 = vld [vmem:[#allocation2 + $0xd0] sm:$0xff]
        %v435 = vld [vmem:[#allocation2 + $0xd8] sm:$0xff]
        %v436 = vld [vmem:[#allocation2 + $0xe0] sm:$0xff]
        %v437 = vld [vmem:[#allocation2 + $0xe8] sm:$0xff]
        %v438 = vld [vmem:[#allocation2 + $0xf0] sm:$0xff]
        %v439 = vld [vmem:[#allocation2 + $0xf8] sm:$0xff]
        %v440 = vld [vmem:[%s4] sm:$0x3]
        %v442 = vlaneseq
        %v443 = vshrl.u32 %v442, 7
        %v444 = vsub.s32 0, %v443
        %v445 = vrot.slane %v440, %v444
        %v446 = vlaneseq
        %v447 = vshrl.u32 %v446, 7
        %v448 = vsub.s32 1, %v447
        %v449 = vrot.slane %v440, %v448
        %v484 = vunpack.c.l.b16 %v408
        %v485 = vunpack.c.h.b16 %v408
        %v486 = vunpack.c.l.b16 %v409
        %v487 = vunpack.c.h.b16 %v409
        %v488 = vunpack.c.l.b16 %v410
        %v489 = vunpack.c.h.b16 %v410
        %v490 = vunpack.c.l.b16 %v411
        %v491 = vunpack.c.h.b16 %v411
        %v492 = vunpack.c.l.b16 %v412
        %v493 = vunpack.c.h.b16 %v412
        %v494 = vunpack.c.l.b16 %v413
        %v495 = vunpack.c.h.b16 %v413
        %v496 = vunpack.c.l.b16 %v414
        %v497 = vunpack.c.h.b16 %v414
        %v498 = vunpack.c.l.b16 %v415
        %v499 = vunpack.c.h.b16 %v415
        %v500 = vunpack.c.l.b16 %v416
        %v501 = vunpack.c.h.b16 %v416
        %v502 = vunpack.c.l.b16 %v417
        %v503 = vunpack.c.h.b16 %v417
        %v504 = vunpack.c.l.b16 %v418
        %v505 = vunpack.c.h.b16 %v418
        %v506 = vunpack.c.l.b16 %v419
        %v507 = vunpack.c.h.b16 %v419
        %v508 = vunpack.c.l.b16 %v420
        %v509 = vunpack.c.h.b16 %v420
        %v510 = vunpack.c.l.b16 %v421
        %v511 = vunpack.c.h.b16 %v421
        %v512 = vunpack.c.l.b16 %v422
        %v513 = vunpack.c.h.b16 %v422
        %v514 = vunpack.c.l.b16 %v423
        %v515 = vunpack.c.h.b16 %v423
        %v516 = vunpack.c.l.b16 %v424
        %v517 = vunpack.c.h.b16 %v424
        %v518 = vunpack.c.l.b16 %v425
        %v519 = vunpack.c.h.b16 %v425
        %v520 = vunpack.c.l.b16 %v426
        %v521 = vunpack.c.h.b16 %v426
        %v522 = vunpack.c.l.b16 %v427
        %v523 = vunpack.c.h.b16 %v427
        %v524 = vunpack.c.l.b16 %v428
        %v525 = vunpack.c.h.b16 %v428
        %v526 = vunpack.c.l.b16 %v429
        %v527 = vunpack.c.h.b16 %v429
        %v528 = vunpack.c.l.b16 %v430
        %v529 = vunpack.c.h.b16 %v430
        %v530 = vunpack.c.l.b16 %v431
        %v531 = vunpack.c.h.b16 %v431
        %v532 = vunpack.c.l.b16 %v432
        %v533 = vunpack.c.h.b16 %v432
        %v534 = vunpack.c.l.b16 %v433
        %v535 = vunpack.c.h.b16 %v433
        %v536 = vunpack.c.l.b16 %v434
        %v537 = vunpack.c.h.b16 %v434
        %v538 = vunpack.c.l.b16 %v435
        %v539 = vunpack.c.h.b16 %v435
        %v540 = vunpack.c.l.b16 %v436
        %v541 = vunpack.c.h.b16 %v436
        %v542 = vunpack.c.l.b16 %v437
        %v543 = vunpack.c.h.b16 %v437
        %v544 = vunpack.c.l.b16 %v438
        %v545 = vunpack.c.h.b16 %v438
        %v546 = vunpack.c.l.b16 %v439
        %v547 = vunpack.c.h.b16 %v439
        %v548 = vpack.c.b16 %v486, %v484
        %v549 = vpack.c.b16 %v487, %v485
        %v550 = vpack.c.b16 %v490, %v488
        %v551 = vpack.c.b16 %v491, %v489
        %v552 = vpack.c.b16 %v494, %v492
        %v553 = vpack.c.b16 %v495, %v493
        %v554 = vpack.c.b16 %v498, %v496
        %v555 = vpack.c.b16 %v499, %v497
        %v556 = vpack.c.b16 %v502, %v500
        %v557 = vpack.c.b16 %v503, %v501
        %v558 = vpack.c.b16 %v506, %v504
        %v559 = vpack.c.b16 %v507, %v505
        %v560 = vpack.c.b16 %v510, %v508
        %v561 = vpack.c.b16 %v511, %v509
        %v562 = vpack.c.b16 %v514, %v512
        %v563 = vpack.c.b16 %v515, %v513
        %v564 = vpack.c.b16 %v518, %v516
        %v565 = vpack.c.b16 %v519, %v517
        %v566 = vpack.c.b16 %v522, %v520
        %v567 = vpack.c.b16 %v523, %v521
        %v568 = vpack.c.b16 %v526, %v524
        %v569 = vpack.c.b16 %v527, %v525
        %v570 = vpack.c.b16 %v530, %v528
        %v571 = vpack.c.b16 %v531, %v529
        %v572 = vpack.c.b16 %v534, %v532
        %v573 = vpack.c.b16 %v535, %v533
        %v574 = vpack.c.b16 %v538, %v536
        %v575 = vpack.c.b16 %v539, %v537
        %v576 = vpack.c.b16 %v542, %v540
        %v577 = vpack.c.b16 %v543, %v541
        %v578 = vpack.c.b16 %v546, %v544
        %v579 = vpack.c.b16 %v547, %v545
        %612 = vmatprep.subr.bf16.mxu0 %v563
        %613 = vmatpush1.bf16.msra.mxu0 %v562
        %614 = vmatprep.subr.bf16.mxu0 %v561
        %615 = vmatpush1.bf16.msra.mxu0 %v560
        %616 = vmatprep.subr.bf16.mxu0 %v559
        %617 = vmatpush1.bf16.msra.mxu0 %v558
        %618 = vmatprep.subr.bf16.mxu0 %v557
        %619 = vmatpush1.bf16.msra.mxu0 %v556
        %620 = vmatprep.subr.bf16.mxu0 %v555
        %621 = vmatpush1.bf16.msra.mxu0 %v554
        %622 = vmatprep.subr.bf16.mxu0 %v553
        %623 = vmatpush1.bf16.msra.mxu0 %v552
        %624 = vmatprep.subr.bf16.mxu0 %v551
        %625 = vmatpush1.bf16.msra.mxu0 %v550
        %626 = vmatprep.subr.bf16.mxu0 %v549
        %627 = vmatpush1.bf16.msra.mxu0 %v548
        %628 = vmatprep.subr.bf16.mxu0 %v579
        %629 = vmatpush2.bf16.msra.mxu0 %v578
        %630 = vmatprep.subr.bf16.mxu0 %v577
        %631 = vmatpush2.bf16.msra.mxu0 %v576
        %632 = vmatprep.subr.bf16.mxu0 %v575
        %633 = vmatpush2.bf16.msra.mxu0 %v574
        %634 = vmatprep.subr.bf16.mxu0 %v573
        %635 = vmatpush2.bf16.msra.mxu0 %v572
        %636 = vmatprep.subr.bf16.mxu0 %v571
        %637 = vmatpush2.bf16.msra.mxu0 %v570
        %638 = vmatprep.subr.bf16.mxu0 %v569
        %639 = vmatpush2.bf16.msra.mxu0 %v568
        %640 = vmatprep.subr.bf16.mxu0 %v567
        %641 = vmatpush2.bf16.msra.mxu0 %v566
        %642 = vmatprep.subr.bf16.mxu0 %v565
        %643 = vmatpush2.bf16.msra.mxu0 %v564
        %644 = vmatprep.mubr.bf16.mxu0 %v407
        %645 = vmatmul.mubr.bf16.gmra.mxu0 %v406
        %v646 = vpop.f32.mrf.mxu0
        %v647 = vadd.f32 %v445, %v646
        %v648 = vpop.f32.mrf.mxu0
        %v649 = vadd.f32 %v449, %v648
        %v650 = vpop.f32.mrf.mxu0
        %v651 = vadd.f32 %v445, %v650
        %v652 = vpop.f32.mrf.mxu0
        %v653 = vadd.f32 %v449, %v652
        %654 = vdwg.mxu0
        %v655 = vmax.f32 %v647, 0.0
        %v656 = vmax.f32 %v649, 0.0
        %v657 = vmax.f32 %v651, 0.0
        %v658 = vmax.f32 %v653, 0.0
        %v659 = vpack.c.bf16 %v657, %v655
        %v660 = vpack.c.bf16 %v658, %v656
        %v661 = vld [vmem:[#allocation4] sm:$0xf]
        %v662 = vld [vmem:[#allocation4 + $0x4] sm:$0xf]
        %v663 = vld [vmem:[#allocation4 + $0x8] sm:$0xf]
        %v664 = vld [vmem:[#allocation4 + $0xc] sm:$0xf]
        %v665 = vld [vmem:[#allocation4 + $0x10] sm:$0xf]
        %v666 = vld [vmem:[#allocation4 + $0x14] sm:$0xf]
        %v667 = vld [vmem:[#allocation4 + $0x18] sm:$0xf]
        %v668 = vld [vmem:[#allocation4 + $0x1c] sm:$0xf]
        %v669 = vld [vmem:[#allocation4 + $0x20] sm:$0xf]
        %v670 = vld [vmem:[#allocation4 + $0x24] sm:$0xf]
        %v671 = vld [vmem:[#allocation4 + $0x28] sm:$0xf]
        %v672 = vld [vmem:[#allocation4 + $0x2c] sm:$0xf]
        %v673 = vld [vmem:[#allocation4 + $0x30] sm:$0xf]
        %v674 = vld [vmem:[#allocation4 + $0x34] sm:$0xf]
        %v675 = vld [vmem:[#allocation4 + $0x38] sm:$0xf]
        %v676 = vld [vmem:[#allocation4 + $0x3c] sm:$0xf]
        %v677 = vld [vmem:[#allocation4 + $0x40] sm:$0xf]
        %v678 = vld [vmem:[#allocation4 + $0x44] sm:$0xf]
        %v679 = vld [vmem:[#allocation4 + $0x48] sm:$0xf]
        %v680 = vld [vmem:[#allocation4 + $0x4c] sm:$0xf]
        %v681 = vld [vmem:[#allocation4 + $0x50] sm:$0xf]
        %v682 = vld [vmem:[#allocation4 + $0x54] sm:$0xf]
        %v683 = vld [vmem:[#allocation4 + $0x58] sm:$0xf]
        %v684 = vld [vmem:[#allocation4 + $0x5c] sm:$0xf]
        %v685 = vld [vmem:[#allocation4 + $0x60] sm:$0xf]
        %v686 = vld [vmem:[#allocation4 + $0x64] sm:$0xf]
        %v687 = vld [vmem:[#allocation4 + $0x68] sm:$0xf]
        %v688 = vld [vmem:[#allocation4 + $0x6c] sm:$0xf]
        %v689 = vld [vmem:[#allocation4 + $0x70] sm:$0xf]
        %v690 = vld [vmem:[#allocation4 + $0x74] sm:$0xf]
        %v691 = vld [vmem:[#allocation4 + $0x78] sm:$0xf]
        %v692 = vld [vmem:[#allocation4 + $0x7c] sm:$0xf]
        %v693 = vld [vmem:[%s6] sm:$0x1]
        %v695 = vlaneseq
        %v696 = vshrl.u32 %v695, 7
        %v697 = vsub.s32 0, %v696
        %v698 = vrot.slane %v693, %v697
        %v732 = vunpack.c.l.b16 %v661
        %v733 = vunpack.c.l.b16 %v662
        %v734 = vunpack.c.l.b16 %v663
        %v735 = vunpack.c.l.b16 %v664
        %v736 = vunpack.c.l.b16 %v665
        %v737 = vunpack.c.l.b16 %v666
        %v738 = vunpack.c.l.b16 %v667
        %v739 = vunpack.c.l.b16 %v668
        %v740 = vunpack.c.l.b16 %v669
        %v741 = vunpack.c.l.b16 %v670
        %v742 = vunpack.c.l.b16 %v671
        %v743 = vunpack.c.l.b16 %v672
        %v744 = vunpack.c.l.b16 %v673
        %v745 = vunpack.c.l.b16 %v674
        %v746 = vunpack.c.l.b16 %v675
        %v747 = vunpack.c.l.b16 %v676
        %v748 = vunpack.c.l.b16 %v677
        %v749 = vunpack.c.l.b16 %v678
        %v750 = vunpack.c.l.b16 %v679
        %v751 = vunpack.c.l.b16 %v680
        %v752 = vunpack.c.l.b16 %v681
        %v753 = vunpack.c.l.b16 %v682
        %v754 = vunpack.c.l.b16 %v683
        %v755 = vunpack.c.l.b16 %v684
        %v756 = vunpack.c.l.b16 %v685
        %v757 = vunpack.c.l.b16 %v686
        %v758 = vunpack.c.l.b16 %v687
        %v759 = vunpack.c.l.b16 %v688
        %v760 = vunpack.c.l.b16 %v689
        %v761 = vunpack.c.l.b16 %v690
        %v762 = vunpack.c.l.b16 %v691
        %v763 = vunpack.c.l.b16 %v692
        %v764 = vpack.c.b16 %v733, %v732
        %v765 = vpack.c.b16 %v735, %v734
        %v766 = vpack.c.b16 %v737, %v736
        %v767 = vpack.c.b16 %v739, %v738
        %v768 = vpack.c.b16 %v741, %v740
        %v769 = vpack.c.b16 %v743, %v742
        %v770 = vpack.c.b16 %v745, %v744
        %v771 = vpack.c.b16 %v747, %v746
        %v772 = vpack.c.b16 %v749, %v748
        %v773 = vpack.c.b16 %v751, %v750
        %v774 = vpack.c.b16 %v753, %v752
        %v775 = vpack.c.b16 %v755, %v754
        %v776 = vpack.c.b16 %v757, %v756
        %v777 = vpack.c.b16 %v759, %v758
        %v778 = vpack.c.b16 %v761, %v760
        %v779 = vpack.c.b16 %v763, %v762
        %796 = vmatprep.subr.bf16.mxu0 0
        %797 = vmatpush1.bf16.msra.mxu0 %v771
        %798 = vmatprep.subr.bf16.mxu0 0
        %799 = vmatpush1.bf16.msra.mxu0 %v770
        %800 = vmatprep.subr.bf16.mxu0 0
        %801 = vmatpush1.bf16.msra.mxu0 %v769
        %802 = vmatprep.subr.bf16.mxu0 0
        %803 = vmatpush1.bf16.msra.mxu0 %v768
        %804 = vmatprep.subr.bf16.mxu0 0
        %805 = vmatpush1.bf16.msra.mxu0 %v767
        %806 = vmatprep.subr.bf16.mxu0 0
        %807 = vmatpush1.bf16.msra.mxu0 %v766
        %808 = vmatprep.subr.bf16.mxu0 0
        %809 = vmatpush1.bf16.msra.mxu0 %v765
        %810 = vmatprep.subr.bf16.mxu0 0
        %811 = vmatpush1.bf16.msra.mxu0 %v764
        %812 = vmatprep.subr.bf16.mxu0 0
        %813 = vmatpush2.bf16.msra.mxu0 %v779
        %814 = vmatprep.subr.bf16.mxu0 0
        %815 = vmatpush2.bf16.msra.mxu0 %v778
        %816 = vmatprep.subr.bf16.mxu0 0
        %817 = vmatpush2.bf16.msra.mxu0 %v777
        %818 = vmatprep.subr.bf16.mxu0 0
        %819 = vmatpush2.bf16.msra.mxu0 %v776
        %820 = vmatprep.subr.bf16.mxu0 0
        %821 = vmatpush2.bf16.msra.mxu0 %v775
        %822 = vmatprep.subr.bf16.mxu0 0
        %823 = vmatpush2.bf16.msra.mxu0 %v774
        %824 = vmatprep.subr.bf16.mxu0 0
        %825 = vmatpush2.bf16.msra.mxu0 %v773
        %826 = vmatprep.subr.bf16.mxu0 0
        %827 = vmatpush2.bf16.msra.mxu0 %v772
        %828 = vmatprep.mubr.bf16.mxu0 %v660
        %829 = vmatmul.mubr.bf16.gmra.mxu0 %v659
        %v830 = vpop.f32.mrf.mxu0
        %v831 = vadd.f32 %v698, %v830
        %v832 = vpop.f32.mrf.mxu0
        %v833 = vpop.f32.mrf.mxu0
        %v834 = vadd.f32 %v698, %v833
        %v835 = vpop.f32.mrf.mxu0
        %836 = vdwg.mxu0
        %v837 = vmul.f32 %v831, 0.1
        %v838 = vmul.f32 %v834, 0.1
        %v839 = vxor.u32 %v837, 2147483648
        %v840 = vxor.u32 %v838, 2147483648
        %v841 = vmul.f32 %v839, 1.442695
        %v842 = vpow.pop %v841
        %v843 = vmul.f32 %v840, 1.442695
        %v844 = vpow.pop %v843
        %v845 = vadd.f32 %v842, 1.0
        %v846 = vadd.f32 %v844, 1.0
        %v847 = vrcp.pop %v845
        %v848 = vmul.f32 1.0, %v847
        %v849 = vrcp.pop %v846
        %v850 = vmul.f32 1.0, %v849
        %v851 = vmul.f32 %v848, 120.0
        %v852 = vmul.f32 %v850, 120.0
        %vm853 = vcmask 89088
        %854 = vst.msk [vmem:[%s310] sm:$0xff] %vm853, %v851
        %855 = vst.msk [vmem:[%s310 + $0x8] sm:$0xff] %vm853, %v852
        %s856 = smul.u32 2, %s20
        %p857 = scmp.lt.s32.totalorder %s856, 3
        %s858 = scalar_select %p857, %s856, 3
        %s859 = smul.addr %s858, 8
        %s860 = scalar_lea.vmem %s7, %s859
        // Predicated region
        $region57: #{tpu_custom_call.1} parent=47 // pred_check
          %p861 = pneg %p190
        $region58: #{tpu_custom_call.1} parent=47 // pred_check_branch
          %863 = sbr.rel (%p861) target = $region60
        $region59: #{tpu_custom_call.1} parent=47 // pred_region
          %s864 = smul.u32 2, %s20
        $region60: #{tpu_custom_call.1} parent=47 // pred_fallthru
          _
      $region48: #{tpu_custom_call.1} parent=5 // pred_fallthru
        _
      %p865 = scmp.le.s32.totalorder 2, %s15
      // Predicated region
      $region61: #{tpu_custom_call.1} parent=5 // pred_check
        %p866 = pneg %p865
      $region62: #{tpu_custom_call.1} parent=5 // pred_check_branch
        %868 = sbr.rel (%p866) target = $region64
      $region63: #{tpu_custom_call.1} parent=5 // pred_region
        %s869 = ssub.s32 %s15, 2
        // Predicated region
        $region65: #{tpu_custom_call.1} parent=63 // pred_check
          %p870 = pneg %p196
        $region66: #{tpu_custom_call.1} parent=63 // pred_check_branch
          %872 = sbr.rel (%p870) target = $region68
        $region67: #{tpu_custom_call.1} parent=63 // pred_region
          %s873 = smul.u32 2, %s21
          %p874 = scmp.lt.s32.totalorder %s873, 3
          %s875 = scalar_select %p874, %s873, 3
          %s876 = smul.addr %s875, 8
          %s877 = scalar_lea.vmem %s7, %s876
        $region68: #{tpu_custom_call.1} parent=63 // pred_fallthru
          _
      $region64: #{tpu_custom_call.1} parent=5 // pred_fallthru
        _
    $region6: #{tpu_custom_call.1} parent=1 // loop_footer
      %s19 = sadd.s32 1, %s15
    $region7: #{tpu_custom_call.1} parent=1 // loop_footer_branch
      %14 = sbr.rel target = $region3
    $region8: #{tpu_custom_call.1} parent=1 // loop_exit
      _
    %878 = vsyncpa [#allocation3], 1
    %s879 = scalar_lea.sflag [#allocation3], 1
    %880 = vsyncpa %s879, 1
    %881 = vsyncpa [#allocation5], 1

</llo_original>
